<compile_context>
chip_gen: v6e
topology: v6e:2x2x1
jax: 0.10.0
libtpu: 0.0.40
codegen_flags: <defaults>
</compile_context>

<pallas_src>
import jax
import jax.numpy as jnp
from jax.experimental import pallas as pl
from jax.experimental.pallas import tpu as pltpu


def _value_head_kernel(h_ref, w_ref, b_ref, o_ref):
    # h_ref: [TILE, H] (backbone native dtype), w_ref: [1, H] f32,
    # b_ref: [1, 1] SMEM f32, o_ref: [TILE, 1] f32
    h = h_ref[...].astype(jnp.float32)                 # upcast in-kernel (no HBM copy)
    w = w_ref[...].astype(jnp.float32)                 # [1, H] broadcasts over rows
    v = jnp.sum(h * w, axis=-1, keepdims=True)         # VPU mul + XLU lane-reduce, f32 acc
    o_ref[...] = v + b_ref[0, 0]


def _round_up(x, m):
    return (x + m - 1) // m * m


def _pick_tile(n_rows, hidden, itemsize):
    # Double-buffered input block (2 * TILE * H * itemsize) kept under ~24 MiB so it
    # fits the 32 MiB scoped-VMEM default on v5e/v6e/v7x alike.
    budget = 24 * 1024 * 1024
    t = budget // (2 * hidden * max(1, itemsize))
    t = max(8, (t // 8) * 8)
    t = min(t, 1024)
    if t >= n_rows:
        return _round_up(n_rows, 8)                    # single full-extent tile
    return t


def value_head_pallas(hidden_tokens, head_w, head_b):
    """hidden_tokens: [B, T, H] (any float dtype), head_w: [H] f32, head_b: scalar f32
    -> [B, T] f32 (Linear(H, 1) applied per token, squeeze(-1))."""
    B, T, H = hidden_tokens.shape
    n = B * T
    x = hidden_tokens.reshape(n, H)                    # keep backbone's native dtype

    tile = _pick_tile(n, H, x.dtype.itemsize)
    n_pad = pl.cdiv(n, tile) * tile
    if n_pad != n:
        x = jnp.pad(x, ((0, n_pad - n), (0, 0)))       # pad only the (small) sliced rows

    w2d = head_w.reshape(1, H).astype(jnp.float32)
    b2d = jnp.asarray(head_b, jnp.float32).reshape(1, 1)

    out = pl.pallas_call(
        _value_head_kernel,
        out_shape=jax.ShapeDtypeStruct((n_pad, 1), jnp.float32),
        grid=(n_pad // tile,),
        in_specs=[
            pl.BlockSpec((tile, H), lambda i: (i, 0)),                        # hidden rows
            pl.BlockSpec((1, H), lambda i: (0, 0)),                           # head weight (resident)
            pl.BlockSpec((1, 1), lambda i: (0, 0), memory_space=pltpu.SMEM),  # head bias
        ],
        out_specs=pl.BlockSpec((tile, 1), lambda i: (i, 0)),
        compiler_params=pltpu.CompilerParams(
            dimension_semantics=("parallel",)),        # megacore sharding on v7x
    )(x, w2d, b2d)

    return out[:n, 0].reshape(B, T)


def critic_forward(params, input_ids, attention_mask, num_actions):
    """Mirrors CriticModel.forward.

    input_ids:      [B, S] int32
    attention_mask: [B, S] int/float
    num_actions:    python int
    returns value:  [B, num_actions] float32
    """
    # --- synthetic backbone (glue, plain JAX): bf16 embedding lookup masked by attention_mask
    emb = params["embedding"]                                              # [V, H] bf16
    hidden_state = emb[input_ids] * attention_mask[..., None].astype(emb.dtype)  # [B, S, H] bf16

    # Slice to the last num_actions tokens BEFORE the kernel: the head only needs
    # these rows, so this cuts HBM reads by S/num_actions.
    hidden_actions = hidden_state[:, -num_actions:, :]                     # [B, T, H]

    # --- value head (hot path) in Pallas
    value = value_head_pallas(hidden_actions, params["head_w"], params["head_b"])  # [B, T]
    return value


def init_params(key, vocab_size, hidden_size):
    k_emb, k_w, k_b = jax.random.split(key, 3)
    return {
        # backbone "last_hidden_state" producer kept in bf16 (typical LM native dtype)
        "embedding": (jax.random.normal(k_emb, (vocab_size, hidden_size), jnp.float32)
                      * 0.02).astype(jnp.bfloat16),
        # nn.Linear(hidden_size, 1): weight [1, H], bias [1]; stored flattened, f32.
        "head_w": jax.random.normal(k_w, (hidden_size,), jnp.float32)
        * (1.0 / jnp.sqrt(hidden_size)),
        "head_b": jax.random.normal(k_b, (), jnp.float32) * 0.01,
    }


if __name__ == "__main__":
    B, S, H, V = 2, 8, 32, 50
    num_actions = 4

    key = jax.random.PRNGKey(0)
    k_params, k_ids = jax.random.split(key)

    params = init_params(k_params, V, H)
    input_ids = jax.random.randint(k_ids, (B, S), 0, V, dtype=jnp.int32)
    attention_mask = jnp.ones((B, S), dtype=jnp.int32)

    value = critic_forward(params, input_ids, attention_mask, num_actions)
    value = jax.block_until_ready(value)

    # reference check (pure JAX) for the value-head path on the same bf16 hidden states
    hidden_ref = (params["embedding"][input_ids]
                  * attention_mask[..., None].astype(params["embedding"].dtype))
    hidden_ref = hidden_ref[:, -num_actions:, :].astype(jnp.float32)
    value_ref = jnp.sum(hidden_ref * params["head_w"], axis=-1) + params["head_b"]

    assert value.shape == (B, num_actions)
    assert jnp.allclose(value, value_ref, atol=1e-4), "mismatch vs reference"

    print("KERNEL_OK")
</pallas_src>

<mosaic_0001>
module attributes {stable_mosaic.version = 11 : i64} {
  func.func @_value_head_kernel(%arg0: i32, %arg1: memref<8x32xbf16, #tpu.memory_space<vmem>>, %arg2: memref<1x32xf32, #tpu.memory_space<vmem>>, %arg3: memref<1x1xf32, #tpu.memory_space<smem>>, %arg4: memref<8x1xf32, #tpu.memory_space<vmem>>) attributes {dimension_semantics = [#tpu.dimension_semantics<parallel>], iteration_bounds = array<i64: 1>, scalar_prefetch = 0 : i64, scratch_operands = 0 : i64, tpu.core_type = #tpu.core_type<tc>, window_params = [{transform_indices = @transform_0, window_bounds = array<i64: 8, 32>}, {pipeline_mode = #tpu.pipeline_mode<synchronous>, transform_indices = @transform_1, window_bounds = array<i64: 1, 32>}, {transform_indices = @transform_2, window_bounds = array<i64: 1, 1>}, {transform_indices = @transform_3, window_bounds = array<i64: 8, 1>}]} {
    %c0 = arith.constant 0 : index
    %c0_0 = arith.constant 0 : index
    %0 = vector.load %arg1[%c0, %c0_0] : memref<8x32xbf16, #tpu.memory_space<vmem>>, vector<8x32xbf16>
    %1 = arith.extf %0 : vector<8x32xbf16> to vector<8x32xf32>
    %c0_1 = arith.constant 0 : index
    %c0_2 = arith.constant 0 : index
    %2 = vector.load %arg2[%c0_1, %c0_2] : memref<1x32xf32, #tpu.memory_space<vmem>>, vector<1x32xf32>
    %3 = vector.broadcast %2 : vector<1x32xf32> to vector<8x32xf32>
    %4 = arith.mulf %1, %3 : vector<8x32xf32>
    %cst = arith.constant dense<0.000000e+00> : vector<8xf32>
    %5 = vector.multi_reduction <add>, %4, %cst [1] : vector<8x32xf32> to vector<8xf32>
    %6 = vector.shape_cast %5 : vector<8xf32> to vector<8x1xf32>
    %c0_3 = arith.constant 0 : index
    %c0_4 = arith.constant 0 : index
    %7 = memref.load %arg3[%c0_3, %c0_4] : memref<1x1xf32, #tpu.memory_space<smem>>
    %8 = vector.broadcast %7 : f32 to vector<8x1xf32>
    %9 = arith.addf %6, %8 : vector<8x1xf32>
    %c0_5 = arith.constant 0 : index
    %c0_6 = arith.constant 0 : index
    %10 = vector.load %arg4[%c0_5, %c0_6] : memref<8x1xf32, #tpu.memory_space<vmem>>, vector<8x1xf32>
    tpu.vector_store %arg4[%c0_5, %c0_6], %9 {strides = array<i32>} : memref<8x1xf32, #tpu.memory_space<vmem>>, vector<8x1xf32>,
    return
  }
  func.func @transform_0(%arg0: i32) -> (i32, i32) {
    %c0_i32 = arith.constant 0 : i32
    %c0_i32_0 = arith.constant 0 : i32
    return %arg0, %c0_i32 : i32, i32
  }
  func.func @transform_1(%arg0: i32) -> (i32, i32) {
    %c0_i32 = arith.constant 0 : i32
    %c0_i32_0 = arith.constant 0 : i32
    %c0_i32_1 = arith.constant 0 : i32
    return %c0_i32, %c0_i32_0 : i32, i32
  }
  func.func @transform_2(%arg0: i32) -> (i32, i32) {
    %c0_i32 = arith.constant 0 : i32
    %c0_i32_0 = arith.constant 0 : i32
    %c0_i32_1 = arith.constant 0 : i32
    return %c0_i32, %c0_i32_0 : i32, i32
  }
  func.func @transform_3(%arg0: i32) -> (i32, i32) {
    %c0_i32 = arith.constant 0 : i32
    %c0_i32_0 = arith.constant 0 : i32
    return %arg0, %c0_i32 : i32, i32
  }
}

</mosaic_0001>

<llo_original>
// kernel: tpu_custom_call.1
$region0: #{tpu_custom_call.1}
  #allocation0 [shape = 'u32[]', space=smem, size = 0x4, offset = 0x4, fixed_abs, tag = 'smem constant byte address 0x4 - core index']
  #allocation1 [shape = 'u32[144,128]{1,0:T(1,128)}', space=vmem, size = 0x12000, scoped, tag = 'internal scratch']
  #allocation2 [shape = 'f32[1,1]{1,0:T(1,128)S(6)}', space=smem, size = 0x200, scoped, tag = 'scoped memory for tpu_custom_call.1']
  %s0 = inlined_call_operand.hbm [shape: bf16[8,32], index: 0, kind: input, shape index: {}]
  %s1 = inlined_call_operand.vmem [shape: f32[1,32], index: 1, kind: input, shape index: {}]
  %s2 = inlined_call_operand.<no memory space> [shape: f32[1,1], index: 2, kind: input, shape index: {}]
  %s3 = inlined_call_operand.vmem [shape: f32[8,1], index: 3, kind: output, shape index: {}]
  %s4 = sld [smem:[#allocation0]]
  $region26: #{tpu_custom_call.1} parent=0
    _
  %s6 = ssub.s32 1, %s4
  %s7 = scalar_select 0, %s6, %s4
  %8 = sst [smem:[#allocation2]] %s2
  $region1: #{tpu_custom_call.1} parent=0
    #allocation3 [shape = 'u8[2048]{0}', space=vmem, size = 0x800, scoped, tag = 'input window, operand 0, single buffered']
    #allocation4 [shape = 's32[1]{0}', space=sflag, size = 0x4, scoped, tag = 'scoped memory for tpu_custom_call.1']
    %9 = vsyncpa [#allocation4], 0
    // Predicated region
    $region2: #{tpu_custom_call.1} parent=1 // pred_check
      _
    $region3: #{tpu_custom_call.1} parent=1 // pred_check_branch
      %11 = sbr.rel (0) target = $region5
    $region4: #{tpu_custom_call.1} parent=1 // pred_region
      %s13 = ssub.s32 64, 64
      %14 = vsyncadd [#allocation4], %s13
      %s16 = sshll.u32 [#allocation3], 4
      %s17 = int_to_ptr.vmem [resolvable:$true] %s16
      %19 = dma.hbm_to_vmem [thread:$0]  %s0, 64, %s17, [#allocation4]
    $region5: #{tpu_custom_call.1} parent=1 // pred_fallthru
      _
    // Predicated region
    $region6: #{tpu_custom_call.1} parent=1 // pred_check
      _
    $region7: #{tpu_custom_call.1} parent=1 // pred_check_branch
      %21 = sbr.rel (0) target = $region9
    $region8: #{tpu_custom_call.1} parent=1 // pred_region
      _
    $region9: #{tpu_custom_call.1} parent=1 // pred_fallthru
      _
    // Predicated region
    $region10: #{tpu_custom_call.1} parent=1 // pred_check
      _
    $region11: #{tpu_custom_call.1} parent=1 // pred_check_branch
      %23 = sbr.rel (0) target = $region13
    $region12: #{tpu_custom_call.1} parent=1 // pred_region
      _
    $region13: #{tpu_custom_call.1} parent=1 // pred_fallthru
      _
    // Predicated region
    $region14: #{tpu_custom_call.1} parent=1 // pred_check
      _
    $region15: #{tpu_custom_call.1} parent=1 // pred_check_branch
      %25 = sbr.rel (0) target = $region17
    $region16: #{tpu_custom_call.1} parent=1 // pred_region
      %26 = dma.done [#allocation4], 64
    $region17: #{tpu_custom_call.1} parent=1 // pred_fallthru
      _
    %v27 = vld [vmem:[#allocation3] sm:$0xf]
    %v28 = vunpack.c.l.bf16 %v27
    %v29 = vld [vmem:[%s1] sm:$0x1]
    %v31 = vlaneseq
    %v32 = vshrl.u32 %v31, 7
    %v33 = vsub.s32 0, %v32
    %v34 = vrot.slane %v29, %v33
    %v36 = vmul.f32 %v28, %v34
    %vm37 = vcmask 261120
    %v38 = vsel %vm37, %v36, 0.0
    %39 = vadd.xlane.f32.xlu0 %v38
    %v40 = vpop.xlane.xlu0 %39
    %s41 = sld [smem:[#allocation2]]
    %v42 = vstv %s41
    %v43 = vadd.f32 %v40, %v42
    %vm44 = vcmask 7168
    %45 = vst.msk [vmem:[%s3] sm:$0xff] %vm44, %v43
    // Predicated region
    $region18: #{tpu_custom_call.1} parent=1 // pred_check
      _
    $region19: #{tpu_custom_call.1} parent=1 // pred_check_branch
      %47 = sbr.rel (0) target = $region21
    $region20: #{tpu_custom_call.1} parent=1 // pred_region
      _
    $region21: #{tpu_custom_call.1} parent=1 // pred_fallthru
      _
    // Predicated region
    $region22: #{tpu_custom_call.1} parent=1 // pred_check
      _
    $region23: #{tpu_custom_call.1} parent=1 // pred_check_branch
      %49 = sbr.rel (0) target = $region25
    $region24: #{tpu_custom_call.1} parent=1 // pred_region
      _
    $region25: #{tpu_custom_call.1} parent=1 // pred_fallthru
      _
    %50 = vsyncpa [#allocation4], 1

</llo_original>
